<compile_context>
chip_gen: v7x
topology: tpu7x:2x2x1
jax: 0.10.0
libtpu: 0.0.40
codegen_flags: <defaults>
</compile_context>

<pallas_src>
import functools

import jax
import jax.numpy as jnp
from jax.experimental import pallas as pl
from jax.experimental.pallas import tpu as pltpu


def _round_up(x, m):
    return ((x + m - 1) // m) * m


def _conv_matmul_relu_kernel(x_ref, w_ref, b_ref, o_ref):
    # x_ref: (KC_pad, TL)        im2col columns for this lane tile
    # w_ref: (C_out_pad, KC_pad) flattened conv weight, columns ordered (k, ci)
    # b_ref: (C_out_pad, 1)      f32 bias
    # o_ref: (C_out_pad, TL)     lane-dense output tile
    #
    # TODO(synk): at very small channel counts (C_out=8, K*C_in<=16) a pure
    # VPU-FMA formulation would avoid MXU fill/drain latency entirely; the
    # matmul form is kept because it scales to realistic channel counts where
    # the padded contraction feeds the MXU cleanly.
    acc = jnp.dot(w_ref[...], x_ref[...], preferred_element_type=jnp.float32)
    acc = jnp.maximum(acc + b_ref[...], 0.0)          # fused bias + ReLU (f32)
    o_ref[...] = acc.astype(o_ref.dtype)              # single cast, one slab


@functools.partial(jax.jit, static_argnames=("stride", "padding"))
def cnn_module_forward(x_ncl, weight, bias, *, stride=1, padding=0):
    """Forward of CNNModule: Conv1d(stride, padding) followed by ReLU.

    Args:
      x_ncl:  (N, C_in, L)        -- PyTorch layout.
      weight: (C_out, C_in, K)    -- PyTorch Conv1d weight layout.
      bias:   (C_out,)
    Returns:
      (N, C_out, L_out) with L_out = (L + 2*padding - K) // stride + 1
    """
    n, c_in, l = x_ncl.shape
    c_out, _, k = weight.shape
    l_pad = l + 2 * padding
    l_out = (l_pad - k) // stride + 1

    # --- wrapper-side glue (all plain XLA, one-time) -------------------------
    # Conv zero-padding along L.
    x_p = jnp.pad(x_ncl, ((0, 0), (0, 0), (padding, padding)))

    # Wrapper-side im2col: K lane-dense shifted (and stride-phased) slices.
    #   taps[kk][nn, ci, p] = x_p[nn, ci, p*stride + kk]
    taps = [
        x_p[:, :, kk: kk + stride * (l_out - 1) + 1: stride]   # (N, C_in, L_out)
        for kk in range(k)
    ]
    x_taps = jnp.stack(taps, axis=1)                  # (N, K, C_in, L_out)
    x_taps = x_taps.reshape(n, k * c_in, l_out)       # rows ordered (k, ci)

    # Pad contraction rows / output channels to 8-sublane granularity.
    kc = k * c_in
    kc_pad = _round_up(kc, 8)
    c_out_pad = _round_up(c_out, 8)

    # Flatten (N, L_out) into one lane axis (columns ordered (n, p)) and pad
    # it to a multiple of the lane tile TL (TL a multiple of 128, up to 512).
    p_tot = n * l_out
    tl = min(512, _round_up(p_tot, 128))
    p_pad = _round_up(p_tot, tl)

    x_cols = jnp.transpose(x_taps, (1, 0, 2)).reshape(kc, p_tot)
    x_cols = jnp.pad(x_cols, ((0, kc_pad - kc), (0, p_pad - p_tot)))

    # (C_out, C_in, K) -> (C_out_pad, KC_pad) with (k, ci) column ordering.
    w_flat = jnp.transpose(weight, (0, 2, 1)).reshape(c_out, kc)
    w_flat = jnp.pad(w_flat, ((0, c_out_pad - c_out), (0, kc_pad - kc)))
    b_col = jnp.pad(bias, (0, c_out_pad - c_out)).astype(jnp.float32)
    b_col = b_col.reshape(c_out_pad, 1)

    # --- the Pallas kernel: one lane tile per grid step ----------------------
    grid = (p_pad // tl,)
    out_pad = pl.pallas_call(
        _conv_matmul_relu_kernel,
        out_shape=jax.ShapeDtypeStruct((c_out_pad, p_pad), x_ncl.dtype),
        grid=grid,
        in_specs=[
            pl.BlockSpec((kc_pad, tl), lambda j: (0, j)),
            pl.BlockSpec((c_out_pad, kc_pad), lambda j: (0, 0)),
            pl.BlockSpec((c_out_pad, 1), lambda j: (0, 0)),
        ],
        out_specs=pl.BlockSpec((c_out_pad, tl), lambda j: (0, j)),
        compiler_params=pltpu.CompilerParams(
            # Independent lane tiles: shard across v7x's 2 TensorCores.
            dimension_semantics=("parallel",),
            # Per-step footprint is a few hundred KiB at TL=512 (double-buffered
            # input/output tiles + f32 accumulator); 32 MiB is comfortable on
            # every generation, including v7x's 64 MiB physical VMEM.
            vmem_limit_bytes=32 * 1024 * 1024,
        ),
    )(x_cols, w_flat, b_col)

    # Un-pad and restore PyTorch's (N, C_out, L_out) layout (wrapper glue).
    out = out_pad[:c_out, :p_tot].reshape(c_out, n, l_out)
    return jnp.transpose(out, (1, 0, 2))


def _reference_forward(x_ncl, weight, bias, *, stride=1, padding=0):
    """Pure-JAX reference (lax conv) for a correctness check."""
    out = jax.lax.conv_general_dilated(
        x_ncl,
        weight,
        window_strides=(stride,),
        padding=((padding, padding),),
        dimension_numbers=("NCH", "OIH", "NCH"),
    )
    out = out + bias[None, :, None]
    return jnp.maximum(out, 0.0)


if __name__ == "__main__":
    # Module hyper-parameters (small, consistent with CNNModule.__init__).
    in_channels, out_channels = 4, 8
    kernel_size, stride, padding = 3, 1, 1
    batch, length = 2, 16

    key = jax.random.PRNGKey(0)
    kx, kw, kb = jax.random.split(key, 3)

    # Deterministic PyTorch-style init (uniform bound 1/sqrt(fan_in)).
    fan_in = in_channels * kernel_size
    bound = 1.0 / (fan_in ** 0.5)
    weight = jax.random.uniform(
        kw, (out_channels, in_channels, kernel_size),
        minval=-bound, maxval=bound, dtype=jnp.float32)
    bias = jax.random.uniform(
        kb, (out_channels,), minval=-bound, maxval=bound, dtype=jnp.float32)

    x = jax.random.normal(kx, (batch, in_channels, length), dtype=jnp.float32)

    out = cnn_module_forward(x, weight, bias, stride=stride, padding=padding)
    out = jax.block_until_ready(out)

    ref = _reference_forward(x, weight, bias, stride=stride, padding=padding)
    assert out.shape == ref.shape, (out.shape, ref.shape)
    assert jnp.allclose(out, ref, atol=1e-5, rtol=1e-5), "mismatch (stride=1)"

    # Also exercise the stride>1 path (wrapper-side phase split).
    out2 = jax.block_until_ready(
        cnn_module_forward(x, weight, bias, stride=2, padding=0))
    ref2 = _reference_forward(x, weight, bias, stride=2, padding=0)
    assert out2.shape == ref2.shape, (out2.shape, ref2.shape)
    assert jnp.allclose(out2, ref2, atol=1e-5, rtol=1e-5), "mismatch (stride=2)"

    print("KERNEL_OK")
</pallas_src>

<mosaic_0001>
module attributes {stable_mosaic.version = 11 : i64} {
  func.func @_conv_matmul_relu_kernel(%arg0: i32, %arg1: memref<16x128xf32, #tpu.memory_space<vmem>>, %arg2: memref<8x16xf32, #tpu.memory_space<vmem>>, %arg3: memref<8x1xf32, #tpu.memory_space<vmem>>, %arg4: memref<8x128xf32, #tpu.memory_space<vmem>>) attributes {dimension_semantics = [#tpu.dimension_semantics<parallel>], iteration_bounds = array<i64: 1>, scalar_prefetch = 0 : i64, scratch_operands = 0 : i64, tpu.core_type = #tpu.core_type<tc>, window_params = [{transform_indices = @transform_0, window_bounds = array<i64: 16, 128>}, {pipeline_mode = #tpu.pipeline_mode<synchronous>, transform_indices = @transform_1, window_bounds = array<i64: 8, 16>}, {pipeline_mode = #tpu.pipeline_mode<synchronous>, transform_indices = @transform_2, window_bounds = array<i64: 8, 1>}, {transform_indices = @transform_3, window_bounds = array<i64: 8, 128>}]} {
    %c0 = arith.constant 0 : index
    %c0_0 = arith.constant 0 : index
    %0 = vector.load %arg2[%c0, %c0_0] : memref<8x16xf32, #tpu.memory_space<vmem>>, vector<8x16xf32>
    %c0_1 = arith.constant 0 : index
    %c0_2 = arith.constant 0 : index
    %1 = vector.load %arg1[%c0_1, %c0_2] : memref<16x128xf32, #tpu.memory_space<vmem>>, vector<16x128xf32>
    %cst = arith.constant dense<0.000000e+00> : vector<8x128xf32>
    %2 = tpu.matmul %0, %1, %cst {dimension_numbers = #tpu.dot_dimension_numbers<[1], [0], [0], [1], [0, 0, 1, 1], [], []>} : vector<8x16xf32>, vector<16x128xf32>, vector<8x128xf32> -> vector<8x128xf32>
    %c0_3 = arith.constant 0 : index
    %c0_4 = arith.constant 0 : index
    %3 = vector.load %arg3[%c0_3, %c0_4] : memref<8x1xf32, #tpu.memory_space<vmem>>, vector<8x1xf32>
    %4 = vector.broadcast %3 : vector<8x1xf32> to vector<8x128xf32>
    %5 = arith.addf %2, %4 : vector<8x128xf32>
    %cst_5 = arith.constant 0.000000e+00 : f32
    %6 = vector.broadcast %cst_5 : f32 to vector<8x128xf32>
    %7 = arith.maximumf %5, %6 : vector<8x128xf32>
    %c0_6 = arith.constant 0 : index
    %c0_7 = arith.constant 0 : index
    %8 = vector.load %arg4[%c0_6, %c0_7] : memref<8x128xf32, #tpu.memory_space<vmem>>, vector<8x128xf32>
    tpu.vector_store %arg4[%c0_6, %c0_7], %7 {strides = array<i32>} : memref<8x128xf32, #tpu.memory_space<vmem>>, vector<8x128xf32>,
    return
  }
  func.func @transform_0(%arg0: i32) -> (i32, i32) {
    %c0_i32 = arith.constant 0 : i32
    %c0_i32_0 = arith.constant 0 : i32
    return %c0_i32, %arg0 : i32, i32
  }
  func.func @transform_1(%arg0: i32) -> (i32, i32) {
    %c0_i32 = arith.constant 0 : i32
    %c0_i32_0 = arith.constant 0 : i32
    %c0_i32_1 = arith.constant 0 : i32
    return %c0_i32, %c0_i32_0 : i32, i32
  }
  func.func @transform_2(%arg0: i32) -> (i32, i32) {
    %c0_i32 = arith.constant 0 : i32
    %c0_i32_0 = arith.constant 0 : i32
    %c0_i32_1 = arith.constant 0 : i32
    return %c0_i32, %c0_i32_0 : i32, i32
  }
  func.func @transform_3(%arg0: i32) -> (i32, i32) {
    %c0_i32 = arith.constant 0 : i32
    %c0_i32_0 = arith.constant 0 : i32
    return %c0_i32, %arg0 : i32, i32
  }
}

</mosaic_0001>

<llo_original>
// kernel: cnn_module_forward.1
$region0: #{cnn_module_forward.1}
  #allocation0 [shape = 'u32[]', space=smem, size = 0x4, offset = 0x4, fixed_abs, tag = 'smem constant byte address 0x4 - core index']
  #allocation1 [shape = 'u32[144,128]{1,0:T(1,128)}', space=vmem, size = 0x12000, scoped, tag = 'internal scratch']
  %s0 = inlined_call_operand.vmem [shape: f32[16,128], index: 0, kind: input, shape index: {}]
  %s1 = inlined_call_operand.vmem [shape: f32[8,16], index: 1, kind: input, shape index: {}]
  %s2 = inlined_call_operand.vmem [shape: f32[8,1], index: 2, kind: input, shape index: {}]
  %s3 = inlined_call_operand.vmem [shape: f32[8,128], index: 3, kind: output, shape index: {}]
  %s4 = sld [smem:[#allocation0]]
  $region22: #{cnn_module_forward.1} parent=0
    _
  %s6 = ssub.s32 1, %s4
  %s7 = scalar_select 0, %s6, %s4
  // Predicated region
  $region2: #{cnn_module_forward.1} parent=0 // pred_check
    _
  $region3: #{cnn_module_forward.1} parent=0 // pred_check_branch
    %9 = sbr.rel (0) target = $region5
  $region4: #{cnn_module_forward.1} parent=0 // pred_region
    _
  $region5: #{cnn_module_forward.1} parent=0 // pred_fallthru
    _
  // Predicated region
  $region6: #{cnn_module_forward.1} parent=0 // pred_check
    _
  $region7: #{cnn_module_forward.1} parent=0 // pred_check_branch
    %11 = sbr.rel (0) target = $region9
  $region8: #{cnn_module_forward.1} parent=0 // pred_region
    _
  $region9: #{cnn_module_forward.1} parent=0 // pred_fallthru
    _
  // Predicated region
  $region10: #{cnn_module_forward.1} parent=0 // pred_check
    _
  $region11: #{cnn_module_forward.1} parent=0 // pred_check_branch
    %13 = sbr.rel (0) target = $region13
  $region12: #{cnn_module_forward.1} parent=0 // pred_region
    _
  $region13: #{cnn_module_forward.1} parent=0 // pred_fallthru
    _
  %v14 = vld [vmem:[%s1] sm:$0xff]
  %v15 = vld [vmem:[%s0] sm:$0xff]
  %v16 = vld [vmem:[%s0 + $0x8] sm:$0xff]
  %v17 = vld [vmem:[%s2] sm:$0xff]
  %19 = vset.pattern.permute.xlu0 0
  %20 = vperm.xlu0 %19, %v17
  %v21 = vpop.permute.xlu0 %20
  %vm23 = vcmask 130048
  %v25 = vsel %vm23, %v14, 0
  %27 = vmatprep.subr.mxu0 0.0
  %28 = vmatpush1.msra.mxu0 %v15
  %29 = vmatprep.subr.mxu0 0.0
  %30 = vmatpush1.msra.mxu0 %v16
  %31 = vmatprep.subr.mxu0 0.0
  %32 = vmatpush1.msra.mxu0 0.0
  %33 = vmatprep.subr.mxu0 0.0
  %34 = vmatpush1.msra.mxu0 0.0
  %35 = vmatprep.subr.mxu0 0.0
  %36 = vmatpush1.msra.mxu0 0.0
  %37 = vmatprep.subr.mxu0 0.0
  %38 = vmatpush1.msra.mxu0 0.0
  %39 = vmatprep.subr.mxu0 0.0
  %40 = vmatpush1.msra.mxu0 0.0
  %41 = vmatprep.subr.mxu0 0.0
  %42 = vmatpush1.msra.mxu0 0.0
  %43 = vmatprep.subr.mxu0 0.0
  %44 = vmatpush1.msra.mxu0 0.0
  %45 = vmatprep.subr.mxu0 0.0
  %46 = vmatpush1.msra.mxu0 0.0
  %47 = vmatprep.subr.mxu0 0.0
  %48 = vmatpush1.msra.mxu0 0.0
  %49 = vmatprep.subr.mxu0 0.0
  %50 = vmatpush1.msra.mxu0 0.0
  %51 = vmatprep.subr.mxu0 0.0
  %52 = vmatpush1.msra.mxu0 0.0
  %53 = vmatprep.subr.mxu0 0.0
  %54 = vmatpush1.msra.mxu0 0.0
  %55 = vmatprep.subr.mxu0 0.0
  %56 = vmatpush1.msra.mxu0 0.0
  %57 = vmatprep.subr.mxu0 0.0
  %58 = vmatpush1.msra.mxu0 0.0
  %59 = vmatprep.subr.mxu0 0.0
  %60 = vmatpush1.msra.mxu0 0.0
  %61 = vmatprep.subr.mxu0 0.0
  %62 = vmatpush1.msra.mxu0 0.0
  %63 = vmatprep.subr.mxu0 0.0
  %64 = vmatpush1.msra.mxu0 0.0
  %65 = vmatprep.subr.mxu0 0.0
  %66 = vmatpush1.msra.mxu0 0.0
  %67 = vmatprep.subr.mxu0 0.0
  %68 = vmatpush1.msra.mxu0 0.0
  %69 = vmatprep.subr.mxu0 0.0
  %70 = vmatpush1.msra.mxu0 0.0
  %71 = vmatprep.subr.mxu0 0.0
  %72 = vmatpush1.msra.mxu0 0.0
  %73 = vmatprep.subr.mxu0 0.0
  %74 = vmatpush1.msra.mxu0 0.0
  %75 = vmatprep.subr.mxu0 0.0
  %76 = vmatpush1.msra.mxu0 0.0
  %77 = vmatprep.subr.mxu0 0.0
  %78 = vmatpush1.msra.mxu0 0.0
  %79 = vmatprep.subr.mxu0 0.0
  %80 = vmatpush1.msra.mxu0 0.0
  %81 = vmatprep.subr.mxu0 0.0
  %82 = vmatpush1.msra.mxu0 0.0
  %83 = vmatprep.subr.mxu0 0.0
  %84 = vmatpush1.msra.mxu0 0.0
  %85 = vmatprep.subr.mxu0 0.0
  %86 = vmatpush1.msra.mxu0 0.0
  %87 = vmatprep.subr.mxu0 0.0
  %88 = vmatpush1.msra.mxu0 0.0
  %89 = vmatprep.subr.mxu0 0.0
  %90 = vmatpush1.msra.mxu0 0.0
  %91 = vmatprep.mubr.f32.mxu0 0.0
  %92 = vmatmul.mubr.f32.gmra.mrb[0].mxu0 %v25
  %v93 = vpop.f32.mrb[0].mxu0
  %v94 = vadd.f32 %v21, %v93
  %v95 = vpop.f32.mrb[0].mxu0
  %96 = vdwg.mxu0
  %v97 = vmax.f32 %v94, 0.0
  %98 = vst [vmem:[%s3] sm:$0xff] %v97
  // Predicated region
  $region14: #{cnn_module_forward.1} parent=0 // pred_check
    _
  $region15: #{cnn_module_forward.1} parent=0 // pred_check_branch
    %100 = sbr.rel (0) target = $region17
  $region16: #{cnn_module_forward.1} parent=0 // pred_region
    _
  $region17: #{cnn_module_forward.1} parent=0 // pred_fallthru
    _
  // Predicated region
  $region18: #{cnn_module_forward.1} parent=0 // pred_check
    _
  $region19: #{cnn_module_forward.1} parent=0 // pred_check_branch
    %102 = sbr.rel (0) target = $region21
  $region20: #{cnn_module_forward.1} parent=0 // pred_region
    _
  $region21: #{cnn_module_forward.1} parent=0 // pred_fallthru
    _

</llo_original>
